<compile_context>
chip_gen: v5e
topology: v5e:2x2
jax: 0.10.0
libtpu: 0.0.40
codegen_flags: <defaults>
</compile_context>

<pallas_src>
import functools

import jax
import jax.numpy as jnp
from jax.experimental import pallas as pl
from jax.experimental.pallas import tpu as pltpu

_LANE = 128          # lane width: feature dims padded to a multiple of this
_SUBLANE = 8         # f32 sublane group: batch padded to a multiple of this
_TILE_M_TARGET = 512 # batch tile for the pipelined M grid
_MIB = 1 << 20
_V7X_VMEM_BYTES = 64 * _MIB   # tightest per-TensorCore VMEM across generations


def _round_up(n: int, m: int) -> int:
    return ((n + m - 1) // m) * m


def _fused_mlp_kernel(x_ref, *refs, num_layers, compute_dtype):
    """One (TILE_M, K0_pad) batch tile through the whole MLP.

    refs = (w0_ref, b0_ref, w1_ref, b1_ref, ..., o_ref)
      x_ref : (TILE_M, K0_pad)   f32 VMEM tile (pipelined over the M grid)
      wi_ref: (Ki_pad, Ni_pad)   bf16 VMEM, resident (constant block index)
      bi_ref: (1, Ni_pad)        f32  VMEM, resident
      o_ref : (TILE_M, N_last_pad) f32 VMEM tile
    """
    o_ref = refs[-1]
    z = x_ref[...].astype(jnp.float32)
    for i in range(num_layers):                    # static unroll at trace time
        w_ref = refs[2 * i]
        b_ref = refs[2 * i + 1]
        # bf16 operands -> native MXU path on v5e/v6e/v7x; accumulate in f32.
        z = jnp.dot(z.astype(compute_dtype), w_ref[...],
                    preferred_element_type=jnp.float32)
        z = z + b_ref[...]                          # bias-add / ReLU stay f32
        if i != num_layers - 1:
            z = jnp.maximum(z, 0.0)
    o_ref[...] = z.astype(o_ref.dtype)


def toynet_forward_pallas(x_padded, flat_params, *, tile_m, out_dtype,
                          vmem_limit_bytes, flops, bytes_accessed):
    """M-tiled pallas_call: pipelined x/out tiles, resident weights."""
    num_layers = len(flat_params) // 2
    m_pad, k0_pad = x_padded.shape
    n_last_pad = flat_params[-2].shape[1]
    grid = (m_pad // tile_m,)

    weight_specs = []
    for p in flat_params:
        # Constant block index -> DMA'd once, kept resident across all M tiles.
        # TODO(synk): pipeline_mode=pl.Buffered(1) would drop the second buffer
        # on these resident operands once that knob is verified on all gens.
        weight_specs.append(pl.BlockSpec(p.shape, lambda i: (0, 0)))

    kernel = functools.partial(_fused_mlp_kernel, num_layers=num_layers,
                               compute_dtype=flat_params[0].dtype)

    return pl.pallas_call(
        kernel,
        out_shape=jax.ShapeDtypeStruct((m_pad, n_last_pad), out_dtype),
        grid=grid,
        in_specs=[pl.BlockSpec((tile_m, k0_pad), lambda i: (i, 0))] + weight_specs,
        out_specs=pl.BlockSpec((tile_m, n_last_pad), lambda i: (i, 0)),
        compiler_params=pltpu.CompilerParams(
            dimension_semantics=("parallel",),   # v7x: shard batch tiles on 2 TCs
            vmem_limit_bytes=vmem_limit_bytes,
        ),
        cost_estimate=pl.CostEstimate(flops=flops, transcendentals=0,
                                      bytes_accessed=bytes_accessed),
    )(x_padded, *flat_params)


class ToyNetPallas:
    """JAX/Pallas equivalent of ToyNet(num_layers, layer_shapes)."""

    def __init__(self, num_layers, layer_shapes, key,
                 dtype=jnp.float32, weight_dtype=jnp.bfloat16):
        assert len(layer_shapes) == num_layers + 1
        self.num_layers = num_layers
        self.layer_shapes = list(layer_shapes)
        self.dtype = dtype
        self.weight_dtype = weight_dtype

        self.params = []          # unpadded f32 (w_t, b) for the reference
        self.padded_params = []   # lane-padded (w_t_pad bf16, b_pad f32)

        for i in range(num_layers):
            fan_in = layer_shapes[i]
            fan_out = layer_shapes[i + 1]
            key, wk, bk = jax.random.split(key, 3)
            # Deterministic init mimicking PyTorch U(-1/sqrt(fan_in), 1/sqrt(fan_in)).
            bound = 1.0 / (fan_in ** 0.5)
            w = jax.random.uniform(
                wk, (fan_out, fan_in), dtype=jnp.float32, minval=-bound, maxval=bound)
            bvec = jax.random.uniform(
                bk, (fan_out,), dtype=jnp.float32, minval=-bound, maxval=bound)
            w_t = w.T  # (in, out)
            self.params.append((w_t, bvec))

            # One-time layout plumbing: zero-pad to lane multiples of 128,
            # store weights in bf16 (MXU operand), bias in f32 (VPU add).
            k_pad = _round_up(fan_in, _LANE)
            n_pad = _round_up(fan_out, _LANE)
            w_t_pad = (jnp.zeros((k_pad, n_pad), jnp.float32)
                       .at[:fan_in, :fan_out].set(w_t)).astype(weight_dtype)
            b_pad = jnp.zeros((1, n_pad), jnp.float32).at[0, :fan_out].set(bvec)
            self.padded_params.append((w_t_pad, b_pad))

        self._flat_padded = [t for pair in self.padded_params for t in pair]

        # --- VMEM budget (explicit, checked against the tightest gen: v7x) ---
        weight_bytes = sum(int(p.size) * p.dtype.itemsize for p in self._flat_padded)
        k0_pad = self.padded_params[0][0].shape[0]
        n_last_pad = self.padded_params[-1][0].shape[1]
        max_n_pad = max(w.shape[1] for w, _ in self.padded_params)
        tile_bytes = _TILE_M_TARGET * (k0_pad + n_last_pad) * 4      # x + out tile
        act_bytes = _TILE_M_TARGET * max(k0_pad, max_n_pad) * 4      # live activation
        estimate = 2 * weight_bytes + 2 * tile_bytes + act_bytes     # double buffers
        assert estimate <= _V7X_VMEM_BYTES, (
            f"Resident-weight design needs ~{estimate/_MIB:.1f} MiB VMEM, over the "
            f"{_V7X_VMEM_BYTES/_MIB:.0f} MiB v7x per-TensorCore budget; stream the "
            "largest layer's weights (K/N-tiled inner loop) instead.")
        # TODO(synk): for nets that exceed the v7x budget, stream over-sized layer
        # weights with pltpu.emit_pipeline instead of keeping them resident.
        self._vmem_limit_bytes = int(min(max(int(estimate * 1.25), 32 * _MIB),
                                         128 * _MIB))

        self._jit_forward = jax.jit(self._forward_impl)

    # ------------------------------------------------------------------ #
    def _forward_impl(self, x, *flat_params):
        M, K = x.shape
        assert K == self.layer_shapes[0]

        # Batch tiling: one tile for small M, 512-row tiles otherwise.
        if M <= _TILE_M_TARGET:
            m_pad = _round_up(max(M, _SUBLANE), _SUBLANE)
            tile_m = m_pad
        else:
            m_pad = _round_up(M, _TILE_M_TARGET)
            tile_m = _TILE_M_TARGET

        k0_pad = flat_params[0].shape[0]
        n_last_pad = flat_params[-2].shape[1]
        n_last = self.layer_shapes[-1]

        # Pad inside the same jit as the kernel (no separate dispatch/HBM pass).
        x_p = (jnp.zeros((m_pad, k0_pad), jnp.float32)
               .at[:M, :K].set(x.astype(jnp.float32)))

        flops = 2 * m_pad * sum(w.shape[0] * w.shape[1]
                                for w in flat_params[0::2])
        bytes_accessed = (x_p.size * 4 + m_pad * n_last_pad * 4
                          + sum(int(p.size) * p.dtype.itemsize for p in flat_params))

        out_p = toynet_forward_pallas(
            x_p, flat_params, tile_m=tile_m, out_dtype=jnp.float32,
            vmem_limit_bytes=self._vmem_limit_bytes,
            flops=int(flops), bytes_accessed=int(bytes_accessed))
        return out_p[:M, :n_last].astype(self.dtype)

    def __call__(self, x):
        return self._jit_forward(x, *self._flat_padded)

    # ------------------------------------------------------------------ #
    def reference(self, x):
        """Plain-JAX reference with the same numerics as the kernel
        (bf16 weights / bf16 matmul operand, f32 accumulation, f32 bias+ReLU)."""
        z = x.astype(jnp.float32)
        for i, (w_t, b) in enumerate(self.params):
            z = jnp.dot(z.astype(self.weight_dtype),
                        w_t.astype(self.weight_dtype),
                        preferred_element_type=jnp.float32) + b
            if i != self.num_layers - 1:
                z = jnp.maximum(z, 0.0)
        return z.astype(self.dtype)


if __name__ == "__main__":
    key = jax.random.PRNGKey(0)
    key, xk, pk = jax.random.split(key, 3)

    # Small MLP consistent with ToyNet(num_layers=3, layer_shapes=[32, 64, 64, 16])
    num_layers = 3
    layer_shapes = [32, 64, 64, 16]
    batch = 8

    x = jax.random.normal(xk, (batch, layer_shapes[0]), dtype=jnp.float32)

    model = ToyNetPallas(num_layers, layer_shapes, pk)

    out = jax.block_until_ready(model(x))
    ref = model.reference(x)

    assert out.shape == (batch, layer_shapes[-1])
    assert jnp.allclose(out, ref, atol=1e-3, rtol=1e-3), float(
        jnp.max(jnp.abs(out - ref)))

    print("KERNEL_OK")
</pallas_src>

<mosaic_0001>
module attributes {stable_mosaic.version = 11 : i64} {
  func.func @_fused_mlp_kernel(%arg0: i32, %arg1: memref<8x128xf32, #tpu.memory_space<vmem>>, %arg2: memref<128x128xbf16, #tpu.memory_space<vmem>>, %arg3: memref<1x128xf32, #tpu.memory_space<vmem>>, %arg4: memref<128x128xbf16, #tpu.memory_space<vmem>>, %arg5: memref<1x128xf32, #tpu.memory_space<vmem>>, %arg6: memref<128x128xbf16, #tpu.memory_space<vmem>>, %arg7: memref<1x128xf32, #tpu.memory_space<vmem>>, %arg8: memref<8x128xf32, #tpu.memory_space<vmem>>) attributes {dimension_semantics = [#tpu.dimension_semantics<parallel>], iteration_bounds = array<i64: 1>, scalar_prefetch = 0 : i64, scratch_operands = 0 : i64, tpu.core_type = #tpu.core_type<tc>, window_params = [{transform_indices = @transform_0, window_bounds = array<i64: 8, 128>}, {pipeline_mode = #tpu.pipeline_mode<synchronous>, transform_indices = @transform_1, window_bounds = array<i64: 128, 128>}, {pipeline_mode = #tpu.pipeline_mode<synchronous>, transform_indices = @transform_2, window_bounds = array<i64: 1, 128>}, {pipeline_mode = #tpu.pipeline_mode<synchronous>, transform_indices = @transform_3, window_bounds = array<i64: 128, 128>}, {pipeline_mode = #tpu.pipeline_mode<synchronous>, transform_indices = @transform_4, window_bounds = array<i64: 1, 128>}, {pipeline_mode = #tpu.pipeline_mode<synchronous>, transform_indices = @transform_5, window_bounds = array<i64: 128, 128>}, {pipeline_mode = #tpu.pipeline_mode<synchronous>, transform_indices = @transform_6, window_bounds = array<i64: 1, 128>}, {transform_indices = @transform_7, window_bounds = array<i64: 8, 128>}]} {
    %c0 = arith.constant 0 : index
    %c0_0 = arith.constant 0 : index
    %0 = vector.load %arg1[%c0, %c0_0] : memref<8x128xf32, #tpu.memory_space<vmem>>, vector<8x128xf32>
    %1 = arith.truncf %0 : vector<8x128xf32> to vector<8x128xbf16>
    %c0_1 = arith.constant 0 : index
    %c0_2 = arith.constant 0 : index
    %2 = vector.load %arg2[%c0_1, %c0_2] : memref<128x128xbf16, #tpu.memory_space<vmem>>, vector<128x128xbf16>
    %cst = arith.constant dense<0.000000e+00> : vector<8x128xf32>
    %3 = tpu.matmul %1, %2, %cst {dimension_numbers = #tpu.dot_dimension_numbers<[1], [0], [0], [1], [0, 0, 1, 1], [], []>} : vector<8x128xbf16>, vector<128x128xbf16>, vector<8x128xf32> -> vector<8x128xf32>
    %c0_3 = arith.constant 0 : index
    %c0_4 = arith.constant 0 : index
    %4 = vector.load %arg3[%c0_3, %c0_4] : memref<1x128xf32, #tpu.memory_space<vmem>>, vector<1x128xf32>
    %5 = vector.broadcast %4 : vector<1x128xf32> to vector<8x128xf32>
    %6 = arith.addf %3, %5 : vector<8x128xf32>
    %cst_5 = arith.constant 0.000000e+00 : f32
    %7 = vector.broadcast %cst_5 : f32 to vector<8x128xf32>
    %8 = arith.maximumf %6, %7 : vector<8x128xf32>
    %9 = arith.truncf %8 : vector<8x128xf32> to vector<8x128xbf16>
    %c0_6 = arith.constant 0 : index
    %c0_7 = arith.constant 0 : index
    %10 = vector.load %arg4[%c0_6, %c0_7] : memref<128x128xbf16, #tpu.memory_space<vmem>>, vector<128x128xbf16>
    %cst_8 = arith.constant dense<0.000000e+00> : vector<8x128xf32>
    %11 = tpu.matmul %9, %10, %cst_8 {dimension_numbers = #tpu.dot_dimension_numbers<[1], [0], [0], [1], [0, 0, 1, 1], [], []>} : vector<8x128xbf16>, vector<128x128xbf16>, vector<8x128xf32> -> vector<8x128xf32>
    %c0_9 = arith.constant 0 : index
    %c0_10 = arith.constant 0 : index
    %12 = vector.load %arg5[%c0_9, %c0_10] : memref<1x128xf32, #tpu.memory_space<vmem>>, vector<1x128xf32>
    %13 = vector.broadcast %12 : vector<1x128xf32> to vector<8x128xf32>
    %14 = arith.addf %11, %13 : vector<8x128xf32>
    %cst_11 = arith.constant 0.000000e+00 : f32
    %15 = vector.broadcast %cst_11 : f32 to vector<8x128xf32>
    %16 = arith.maximumf %14, %15 : vector<8x128xf32>
    %17 = arith.truncf %16 : vector<8x128xf32> to vector<8x128xbf16>
    %c0_12 = arith.constant 0 : index
    %c0_13 = arith.constant 0 : index
    %18 = vector.load %arg6[%c0_12, %c0_13] : memref<128x128xbf16, #tpu.memory_space<vmem>>, vector<128x128xbf16>
    %cst_14 = arith.constant dense<0.000000e+00> : vector<8x128xf32>
    %19 = tpu.matmul %17, %18, %cst_14 {dimension_numbers = #tpu.dot_dimension_numbers<[1], [0], [0], [1], [0, 0, 1, 1], [], []>} : vector<8x128xbf16>, vector<128x128xbf16>, vector<8x128xf32> -> vector<8x128xf32>
    %c0_15 = arith.constant 0 : index
    %c0_16 = arith.constant 0 : index
    %20 = vector.load %arg7[%c0_15, %c0_16] : memref<1x128xf32, #tpu.memory_space<vmem>>, vector<1x128xf32>
    %21 = vector.broadcast %20 : vector<1x128xf32> to vector<8x128xf32>
    %22 = arith.addf %19, %21 : vector<8x128xf32>
    %c0_17 = arith.constant 0 : index
    %c0_18 = arith.constant 0 : index
    %23 = vector.load %arg8[%c0_17, %c0_18] : memref<8x128xf32, #tpu.memory_space<vmem>>, vector<8x128xf32>
    tpu.vector_store %arg8[%c0_17, %c0_18], %22 {strides = array<i32>} : memref<8x128xf32, #tpu.memory_space<vmem>>, vector<8x128xf32>,
    return
  }
  func.func @transform_0(%arg0: i32) -> (i32, i32) {
    %c0_i32 = arith.constant 0 : i32
    %c0_i32_0 = arith.constant 0 : i32
    return %arg0, %c0_i32 : i32, i32
  }
  func.func @transform_1(%arg0: i32) -> (i32, i32) {
    %c0_i32 = arith.constant 0 : i32
    %c0_i32_0 = arith.constant 0 : i32
    %c0_i32_1 = arith.constant 0 : i32
    return %c0_i32, %c0_i32_0 : i32, i32
  }
  func.func @transform_2(%arg0: i32) -> (i32, i32) {
    %c0_i32 = arith.constant 0 : i32
    %c0_i32_0 = arith.constant 0 : i32
    %c0_i32_1 = arith.constant 0 : i32
    return %c0_i32, %c0_i32_0 : i32, i32
  }
  func.func @transform_3(%arg0: i32) -> (i32, i32) {
    %c0_i32 = arith.constant 0 : i32
    %c0_i32_0 = arith.constant 0 : i32
    %c0_i32_1 = arith.constant 0 : i32
    return %c0_i32, %c0_i32_0 : i32, i32
  }
  func.func @transform_4(%arg0: i32) -> (i32, i32) {
    %c0_i32 = arith.constant 0 : i32
    %c0_i32_0 = arith.constant 0 : i32
    %c0_i32_1 = arith.constant 0 : i32
    return %c0_i32, %c0_i32_0 : i32, i32
  }
  func.func @transform_5(%arg0: i32) -> (i32, i32) {
    %c0_i32 = arith.constant 0 : i32
    %c0_i32_0 = arith.constant 0 : i32
    %c0_i32_1 = arith.constant 0 : i32
    return %c0_i32, %c0_i32_0 : i32, i32
  }
  func.func @transform_6(%arg0: i32) -> (i32, i32) {
    %c0_i32 = arith.constant 0 : i32
    %c0_i32_0 = arith.constant 0 : i32
    %c0_i32_1 = arith.constant 0 : i32
    return %c0_i32, %c0_i32_0 : i32, i32
  }
  func.func @transform_7(%arg0: i32) -> (i32, i32) {
    %c0_i32 = arith.constant 0 : i32
    %c0_i32_0 = arith.constant 0 : i32
    return %arg0, %c0_i32 : i32, i32
  }
}

</mosaic_0001>

<llo_original>
// kernel: _forward_impl.1
$region0: #{_forward_impl.1}
  #allocation0 [shape = 'u32[]', space=smem, size = 0x4, offset = 0x4, fixed_abs, tag = 'smem constant byte address 0x4 - core index']
  #allocation1 [shape = 'u32[72,128]{1,0:T(1,128)}', space=vmem, size = 0x9000, scoped, tag = 'internal scratch']
  %s0 = inlined_call_operand.vmem [shape: f32[8,128], index: 0, kind: input, shape index: {}]
  %s1 = inlined_call_operand.hbm [shape: bf16[128,128], index: 1, kind: input, shape index: {}]
  %s2 = inlined_call_operand.vmem [shape: f32[1,128], index: 2, kind: input, shape index: {}]
  %s3 = inlined_call_operand.hbm [shape: bf16[128,128], index: 3, kind: input, shape index: {}]
  %s4 = inlined_call_operand.vmem [shape: f32[1,128], index: 4, kind: input, shape index: {}]
  %s5 = inlined_call_operand.hbm [shape: bf16[128,128], index: 5, kind: input, shape index: {}]
  %s6 = inlined_call_operand.vmem [shape: f32[1,128], index: 6, kind: input, shape index: {}]
  %s7 = inlined_call_operand.hbm [shape: f32[8,128], index: 7, kind: output, shape index: {}]
  %s8 = sld [smem:[#allocation0]]
  $region50: #{_forward_impl.1} parent=0
    _
  %s10 = ssub.s32 1, %s8
  %s11 = scalar_select 0, %s10, %s8
  $region1: #{_forward_impl.1} parent=0
    #allocation2 [shape = 'u8[32768]{0}', space=vmem, size = 0x8000, scoped, tag = 'input window, operand 1, single buffered']
    #allocation3 [shape = 's32[1]{0}', space=sflag, size = 0x4, scoped, tag = 'scoped memory for _forward_impl.1']
    #allocation4 [shape = 's32[1]{0}', space=sflag, size = 0x4, scoped, tag = 'scoped memory for _forward_impl.1']
    #allocation5 [shape = 'u8[32768]{0}', space=vmem, size = 0x8000, scoped, tag = 'input window, operand 3, single buffered']
    #allocation6 [shape = 's32[1]{0}', space=sflag, size = 0x4, scoped, tag = 'scoped memory for _forward_impl.1']
    #allocation7 [shape = 'u8[32768]{0}', space=vmem, size = 0x8000, scoped, tag = 'input window, operand 5, single buffered']
    #allocation8 [shape = 'u8[4096]{0}', space=vmem, size = 0x1000, scoped, tag = 'output window, operand 0, single buffered']
    %12 = vsyncpa [#allocation3], 0
    %13 = vsyncpa [#allocation6], 0
    %14 = vsyncpa [#allocation4], 0
    // Predicated region
    $region2: #{_forward_impl.1} parent=1 // pred_check
      _
    $region3: #{_forward_impl.1} parent=1 // pred_check_branch
      %16 = sbr.rel (0) target = $region5
    $region4: #{_forward_impl.1} parent=1 // pred_region
      _
    $region5: #{_forward_impl.1} parent=1 // pred_fallthru
      _
    // Predicated region
    $region6: #{_forward_impl.1} parent=1 // pred_check
      _
    $region7: #{_forward_impl.1} parent=1 // pred_check_branch
      %18 = sbr.rel (0) target = $region9
    $region8: #{_forward_impl.1} parent=1 // pred_region
      %20 = vsyncadd [#allocation3], 0
      %s21 = sshll.u32 %s1, 4
      %s22 = int_to_ptr.hbm [resolvable:$true] %s21
      %s23 = sshll.u32 [#allocation2], 4
      %s24 = int_to_ptr.vmem [resolvable:$true] %s23
      %29 = dma.hbm_to_vmem [thread:$0]  %s22, 1024, %s24, [#allocation3], 64, 64, 4
    $region9: #{_forward_impl.1} parent=1 // pred_fallthru
      _
    // Predicated region
    $region10: #{_forward_impl.1} parent=1 // pred_check
      _
    $region11: #{_forward_impl.1} parent=1 // pred_check_branch
      %31 = sbr.rel (0) target = $region13
    $region12: #{_forward_impl.1} parent=1 // pred_region
      _
    $region13: #{_forward_impl.1} parent=1 // pred_fallthru
      _
    // Predicated region
    $region14: #{_forward_impl.1} parent=1 // pred_check
      _
    $region15: #{_forward_impl.1} parent=1 // pred_check_branch
      %33 = sbr.rel (0) target = $region17
    $region16: #{_forward_impl.1} parent=1 // pred_region
      %35 = vsyncadd [#allocation6], 0
      %s36 = sshll.u32 %s3, 4
      %s37 = int_to_ptr.hbm [resolvable:$true] %s36
      %s38 = sshll.u32 [#allocation5], 4
      %s39 = int_to_ptr.vmem [resolvable:$true] %s38
      %44 = dma.hbm_to_vmem [thread:$0]  %s37, 1024, %s39, [#allocation6], 64, 64, 4
    $region17: #{_forward_impl.1} parent=1 // pred_fallthru
      _
    // Predicated region
    $region18: #{_forward_impl.1} parent=1 // pred_check
      _
    $region19: #{_forward_impl.1} parent=1 // pred_check_branch
      %46 = sbr.rel (0) target = $region21
    $region20: #{_forward_impl.1} parent=1 // pred_region
      _
    $region21: #{_forward_impl.1} parent=1 // pred_fallthru
      _
    // Predicated region
    $region22: #{_forward_impl.1} parent=1 // pred_check
      _
    $region23: #{_forward_impl.1} parent=1 // pred_check_branch
      %48 = sbr.rel (0) target = $region25
    $region24: #{_forward_impl.1} parent=1 // pred_region
      %50 = vsyncadd [#allocation6], 0
      %s51 = sshll.u32 %s5, 4
      %s52 = int_to_ptr.hbm [resolvable:$true] %s51
      %s53 = sshll.u32 [#allocation7], 4
      %s54 = int_to_ptr.vmem [resolvable:$true] %s53
      %59 = dma.hbm_to_vmem [thread:$0]  %s52, 1024, %s54, [#allocation6], 64, 64, 4
    $region25: #{_forward_impl.1} parent=1 // pred_fallthru
      _
    // Predicated region
    $region26: #{_forward_impl.1} parent=1 // pred_check
      _
    $region27: #{_forward_impl.1} parent=1 // pred_check_branch
      %61 = sbr.rel (0) target = $region29
    $region28: #{_forward_impl.1} parent=1 // pred_region
      _
    $region29: #{_forward_impl.1} parent=1 // pred_fallthru
      _
    // Predicated region
    $region30: #{_forward_impl.1} parent=1 // pred_check
      _
    $region31: #{_forward_impl.1} parent=1 // pred_check_branch
      %63 = sbr.rel (0) target = $region33
    $region32: #{_forward_impl.1} parent=1 // pred_region
      %65 = dma.done [#allocation3], 1024
    $region33: #{_forward_impl.1} parent=1 // pred_fallthru
      _
    // Predicated region
    $region34: #{_forward_impl.1} parent=1 // pred_check
      _
    $region35: #{_forward_impl.1} parent=1 // pred_check_branch
      %67 = sbr.rel (0) target = $region37
    $region36: #{_forward_impl.1} parent=1 // pred_region
      %69 = dma.done [#allocation6], 1024
    $region37: #{_forward_impl.1} parent=1 // pred_fallthru
      _
    // Predicated region
    $region38: #{_forward_impl.1} parent=1 // pred_check
      _
    $region39: #{_forward_impl.1} parent=1 // pred_check_branch
      %71 = sbr.rel (0) target = $region41
    $region40: #{_forward_impl.1} parent=1 // pred_region
      %73 = dma.done [#allocation6], 1024
    $region41: #{_forward_impl.1} parent=1 // pred_fallthru
      _
    %v74 = vld [vmem:[%s0] sm:$0xff]
    %v75 = vpack.c.bf16 %v74, %v74
    %v76 = vld [vmem:[#allocation2] sm:$0xf]
    %v77 = vld [vmem:[#allocation2 + $0x4] sm:$0xf]
    %v78 = vld [vmem:[#allocation2 + $0x8] sm:$0xf]
    %v79 = vld [vmem:[#allocation2 + $0xc] sm:$0xf]
    %v80 = vld [vmem:[#allocation2 + $0x10] sm:$0xf]
    %v81 = vld [vmem:[#allocation2 + $0x14] sm:$0xf]
    %v82 = vld [vmem:[#allocation2 + $0x18] sm:$0xf]
    %v83 = vld [vmem:[#allocation2 + $0x1c] sm:$0xf]
    %v84 = vld [vmem:[#allocation2 + $0x20] sm:$0xf]
    %v85 = vld [vmem:[#allocation2 + $0x24] sm:$0xf]
    %v86 = vld [vmem:[#allocation2 + $0x28] sm:$0xf]
    %v87 = vld [vmem:[#allocation2 + $0x2c] sm:$0xf]
    %v88 = vld [vmem:[#allocation2 + $0x30] sm:$0xf]
    %v89 = vld [vmem:[#allocation2 + $0x34] sm:$0xf]
    %v90 = vld [vmem:[#allocation2 + $0x38] sm:$0xf]
    %v91 = vld [vmem:[#allocation2 + $0x3c] sm:$0xf]
    %v92 = vld [vmem:[%s2] sm:$0x1]
    %v94 = vperm.slane %v92, 0
    %v112 = vunpack.c.l.b16 %v76
    %v113 = vunpack.c.l.b16 %v77
    %v114 = vunpack.c.l.b16 %v78
    %v115 = vunpack.c.l.b16 %v79
    %v116 = vunpack.c.l.b16 %v80
    %v117 = vunpack.c.l.b16 %v81
    %v118 = vunpack.c.l.b16 %v82
    %v119 = vunpack.c.l.b16 %v83
    %v120 = vunpack.c.l.b16 %v84
    %v121 = vunpack.c.l.b16 %v85
    %v122 = vunpack.c.l.b16 %v86
    %v123 = vunpack.c.l.b16 %v87
    %v124 = vunpack.c.l.b16 %v88
    %v125 = vunpack.c.l.b16 %v89
    %v126 = vunpack.c.l.b16 %v90
    %v127 = vunpack.c.l.b16 %v91
    %v128 = vpack.c.b16 %v113, %v112
    %v129 = vpack.c.b16 %v115, %v114
    %v130 = vpack.c.b16 %v117, %v116
    %v131 = vpack.c.b16 %v119, %v118
    %v132 = vpack.c.b16 %v121, %v120
    %v133 = vpack.c.b16 %v123, %v122
    %v134 = vpack.c.b16 %v125, %v124
    %v135 = vpack.c.b16 %v127, %v126
    %144 = vmatpush.bf16.msra.mxu0 %v135
    %145 = vmatpush.bf16.msra.mxu0 %v134
    %146 = vmatpush.bf16.msra.mxu0 %v133
    %147 = vmatpush.bf16.msra.mxu0 %v132
    %148 = vmatpush.bf16.msra.mxu0 %v131
    %149 = vmatpush.bf16.msra.mxu0 %v130
    %150 = vmatpush.bf16.msra.mxu0 %v129
    %151 = vmatpush.bf16.msra.mxu0 %v128
    %152 = vmatmul.bf16.gmra.mxu0 %v75
    %v153 = vpop.f32.mrf.mxu0
    %v154 = vadd.f32 %v94, %v153
    %v155 = vpop.f32.mrf.mxu0
    %156 = vdwg.mxu0
    %v157 = vmax.f32 %v154, 0.0
    %v158 = vpack.c.bf16 %v157, %v157
    %v159 = vld [vmem:[#allocation5] sm:$0xf]
    %v160 = vld [vmem:[#allocation5 + $0x4] sm:$0xf]
    %v161 = vld [vmem:[#allocation5 + $0x8] sm:$0xf]
    %v162 = vld [vmem:[#allocation5 + $0xc] sm:$0xf]
    %v163 = vld [vmem:[#allocation5 + $0x10] sm:$0xf]
    %v164 = vld [vmem:[#allocation5 + $0x14] sm:$0xf]
    %v165 = vld [vmem:[#allocation5 + $0x18] sm:$0xf]
    %v166 = vld [vmem:[#allocation5 + $0x1c] sm:$0xf]
    %v167 = vld [vmem:[#allocation5 + $0x20] sm:$0xf]
    %v168 = vld [vmem:[#allocation5 + $0x24] sm:$0xf]
    %v169 = vld [vmem:[#allocation5 + $0x28] sm:$0xf]
    %v170 = vld [vmem:[#allocation5 + $0x2c] sm:$0xf]
    %v171 = vld [vmem:[#allocation5 + $0x30] sm:$0xf]
    %v172 = vld [vmem:[#allocation5 + $0x34] sm:$0xf]
    %v173 = vld [vmem:[#allocation5 + $0x38] sm:$0xf]
    %v174 = vld [vmem:[#allocation5 + $0x3c] sm:$0xf]
    %v175 = vld [vmem:[%s4] sm:$0x1]
    %v177 = vperm.slane %v175, 0
    %v195 = vunpack.c.l.b16 %v159
    %v196 = vunpack.c.l.b16 %v160
    %v197 = vunpack.c.l.b16 %v161
    %v198 = vunpack.c.l.b16 %v162
    %v199 = vunpack.c.l.b16 %v163
    %v200 = vunpack.c.l.b16 %v164
    %v201 = vunpack.c.l.b16 %v165
    %v202 = vunpack.c.l.b16 %v166
    %v203 = vunpack.c.l.b16 %v167
    %v204 = vunpack.c.l.b16 %v168
    %v205 = vunpack.c.l.b16 %v169
    %v206 = vunpack.c.l.b16 %v170
    %v207 = vunpack.c.l.b16 %v171
    %v208 = vunpack.c.l.b16 %v172
    %v209 = vunpack.c.l.b16 %v173
    %v210 = vunpack.c.l.b16 %v174
    %v211 = vpack.c.b16 %v196, %v195
    %v212 = vpack.c.b16 %v198, %v197
    %v213 = vpack.c.b16 %v200, %v199
    %v214 = vpack.c.b16 %v202, %v201
    %v215 = vpack.c.b16 %v204, %v203
    %v216 = vpack.c.b16 %v206, %v205
    %v217 = vpack.c.b16 %v208, %v207
    %v218 = vpack.c.b16 %v210, %v209
    %227 = vmatpush.bf16.msra.mxu0 %v218
    %228 = vmatpush.bf16.msra.mxu0 %v217
    %229 = vmatpush.bf16.msra.mxu0 %v216
    %230 = vmatpush.bf16.msra.mxu0 %v215
    %231 = vmatpush.bf16.msra.mxu0 %v214
    %232 = vmatpush.bf16.msra.mxu0 %v213
    %233 = vmatpush.bf16.msra.mxu0 %v212
    %234 = vmatpush.bf16.msra.mxu0 %v211
    %235 = vmatmul.bf16.gmra.mxu0 %v158
    %v236 = vpop.f32.mrf.mxu0
    %v237 = vadd.f32 %v177, %v236
    %v238 = vpop.f32.mrf.mxu0
    %239 = vdwg.mxu0
    %v240 = vmax.f32 %v237, 0.0
    %v241 = vpack.c.bf16 %v240, %v240
    %v242 = vld [vmem:[#allocation7] sm:$0xf]
    %v243 = vld [vmem:[#allocation7 + $0x4] sm:$0xf]
    %v244 = vld [vmem:[#allocation7 + $0x8] sm:$0xf]
    %v245 = vld [vmem:[#allocation7 + $0xc] sm:$0xf]
    %v246 = vld [vmem:[#allocation7 + $0x10] sm:$0xf]
    %v247 = vld [vmem:[#allocation7 + $0x14] sm:$0xf]
    %v248 = vld [vmem:[#allocation7 + $0x18] sm:$0xf]
    %v249 = vld [vmem:[#allocation7 + $0x1c] sm:$0xf]
    %v250 = vld [vmem:[#allocation7 + $0x20] sm:$0xf]
    %v251 = vld [vmem:[#allocation7 + $0x24] sm:$0xf]
    %v252 = vld [vmem:[#allocation7 + $0x28] sm:$0xf]
    %v253 = vld [vmem:[#allocation7 + $0x2c] sm:$0xf]
    %v254 = vld [vmem:[#allocation7 + $0x30] sm:$0xf]
    %v255 = vld [vmem:[#allocation7 + $0x34] sm:$0xf]
    %v256 = vld [vmem:[#allocation7 + $0x38] sm:$0xf]
    %v257 = vld [vmem:[#allocation7 + $0x3c] sm:$0xf]
    %v258 = vld [vmem:[%s6] sm:$0x1]
    %v260 = vperm.slane %v258, 0
    %v278 = vunpack.c.l.b16 %v242
    %v279 = vunpack.c.l.b16 %v243
    %v280 = vunpack.c.l.b16 %v244
    %v281 = vunpack.c.l.b16 %v245
    %v282 = vunpack.c.l.b16 %v246
    %v283 = vunpack.c.l.b16 %v247
    %v284 = vunpack.c.l.b16 %v248
    %v285 = vunpack.c.l.b16 %v249
    %v286 = vunpack.c.l.b16 %v250
    %v287 = vunpack.c.l.b16 %v251
    %v288 = vunpack.c.l.b16 %v252
    %v289 = vunpack.c.l.b16 %v253
    %v290 = vunpack.c.l.b16 %v254
    %v291 = vunpack.c.l.b16 %v255
    %v292 = vunpack.c.l.b16 %v256
    %v293 = vunpack.c.l.b16 %v257
    %v294 = vpack.c.b16 %v279, %v278
    %v295 = vpack.c.b16 %v281, %v280
    %v296 = vpack.c.b16 %v283, %v282
    %v297 = vpack.c.b16 %v285, %v284
    %v298 = vpack.c.b16 %v287, %v286
    %v299 = vpack.c.b16 %v289, %v288
    %v300 = vpack.c.b16 %v291, %v290
    %v301 = vpack.c.b16 %v293, %v292
    %310 = vmatpush.bf16.msra.mxu0 %v301
    %311 = vmatpush.bf16.msra.mxu0 %v300
    %312 = vmatpush.bf16.msra.mxu0 %v299
    %313 = vmatpush.bf16.msra.mxu0 %v298
    %314 = vmatpush.bf16.msra.mxu0 %v297
    %315 = vmatpush.bf16.msra.mxu0 %v296
    %316 = vmatpush.bf16.msra.mxu0 %v295
    %317 = vmatpush.bf16.msra.mxu0 %v294
    %318 = vmatmul.bf16.gmra.mxu0 %v241
    %v319 = vpop.f32.mrf.mxu0
    %v320 = vadd.f32 %v260, %v319
    %v321 = vpop.f32.mrf.mxu0
    %322 = vdwg.mxu0
    %323 = vst [vmem:[#allocation8] sm:$0xff] %v320
    // Predicated region
    $region42: #{_forward_impl.1} parent=1 // pred_check
      _
    $region43: #{_forward_impl.1} parent=1 // pred_check_branch
      %325 = sbr.rel (0) target = $region45
    $region44: #{_forward_impl.1} parent=1 // pred_region
      %327 = vsyncadd [#allocation4], 0
      %s329 = sshll.u32 [#allocation8], 4
      %s330 = int_to_ptr.vmem [resolvable:$true] %s329
      %s331 = sshll.u32 %s7, 4
      %s332 = int_to_ptr.hbm [resolvable:$true] %s331
      %334 = dma.vmem_to_hbm [thread:$0]  %s330, 128, %s332, [#allocation4]
    $region45: #{_forward_impl.1} parent=1 // pred_fallthru
      _
    // Predicated region
    $region46: #{_forward_impl.1} parent=1 // pred_check
      _
    $region47: #{_forward_impl.1} parent=1 // pred_check_branch
      %336 = sbr.rel (0) target = $region49
    $region48: #{_forward_impl.1} parent=1 // pred_region
      %338 = dma.done [#allocation4], 128
    $region49: #{_forward_impl.1} parent=1 // pred_fallthru
      _
    %339 = vsyncpa [#allocation3], 1
    %340 = vsyncpa [#allocation6], 1
    %341 = vsyncpa [#allocation4], 1

</llo_original>
